<compile_context>
chip_gen: v6e
topology: v6e:2x2x1
jax: 0.10.0
libtpu: 0.0.40
codegen_flags: <defaults>
</compile_context>

<pallas_src>
import jax
import jax.numpy as jnp
from jax.experimental import pallas as pl
from jax.experimental.pallas import tpu as pltpu


def _downsample_mm_kernel(p_ref, w_ref, b_ref, o_ref):
    """p_ref: (TL, K) bf16   w_ref: (K, Np) bf16   b_ref: (1, Np) f32   o_ref: (TL, Np)."""
    acc = jnp.dot(p_ref[...], w_ref[...], preferred_element_type=jnp.float32)
    o_ref[...] = (acc + b_ref[...]).astype(o_ref.dtype)


def downsample_pallas(x, weight, bias, *, tile_rows=512, compute_dtype=jnp.bfloat16):
    """x: [B, H, W, Cin] (NHWC). weight: [Cout, Cin, 3, 3] (PyTorch layout). bias: [Cout]."""
    B, H, W, Cin = x.shape
    Cout = weight.shape[0]
    Ho = (H + 2 - 3) // 2 + 1
    Wo = (W + 2 - 3) // 2 + 1
    L = Ho * Wo
    M = B * L          # all output pixels, batch flattened into rows
    K = 9 * Cin        # fused contraction depth (3x3 taps x Cin)

    # --- glue: pad + fuse the 9 shifted/strided taps into the LAST dim ------
    x_pad = jnp.pad(x, ((0, 0), (1, 1), (1, 1), (0, 0)))
    taps = []
    for kh in range(3):
        for kw in range(3):
            taps.append(x_pad[:, kh:kh + 2 * Ho:2, kw:kw + 2 * Wo:2, :])  # [B,Ho,Wo,Cin]
    patches = jnp.concatenate(taps, axis=-1).reshape(M, K).astype(compute_dtype)

    # weight [Cout, Cin, 3, 3] -> [3, 3, Cin, Cout] -> [9*Cin, Cout]
    w_fused = jnp.transpose(weight, (2, 3, 1, 0)).reshape(K, Cout).astype(compute_dtype)

    # --- lane-dense output: pad Cout up to a multiple of 128 -----------------
    Np = max(128, ((Cout + 127) // 128) * 128)
    if Np != Cout:
        w_fused = jnp.pad(w_fused, ((0, 0), (0, Np - Cout)))
        b_pad = jnp.pad(bias, (0, Np - Cout))
    else:
        b_pad = bias
    b2 = b_pad.reshape(1, Np).astype(jnp.float32)

    # --- row tiling: many grid steps, bounded VMEM, megacore-parallel --------
    TL = min(tile_rows, M)
    TL = max(8, (TL // 8) * 8)          # sublane-aligned tile height
    n_tiles = -(-M // TL)               # cdiv
    Mp = n_tiles * TL
    if Mp != M:
        patches = jnp.pad(patches, ((0, Mp - M), (0, 0)))

    out = pl.pallas_call(
        _downsample_mm_kernel,
        out_shape=jax.ShapeDtypeStruct((Mp, Np), x.dtype),
        grid_spec=pltpu.PrefetchScalarGridSpec(
            num_scalar_prefetch=0,
            grid=(n_tiles,),
            in_specs=[
                pl.BlockSpec((TL, K), lambda i: (i, 0)),   # patch rows (pipelined)
                pl.BlockSpec((K, Np), lambda i: (0, 0)),   # fused weights (resident)
                pl.BlockSpec((1, Np), lambda i: (0, 0)),   # bias (resident)
            ],
            out_specs=pl.BlockSpec((TL, Np), lambda i: (i, 0)),
        ),
        compiler_params=pltpu.CompilerParams(
            dimension_semantics=("parallel",),
        ),
    )(patches, w_fused, b2)

    return out[:M, :Cout].reshape(B, Ho, Wo, Cout)


def _reference_conv(x, weight, bias):
    """Plain-JAX f32 reference matching nn.Conv2d(k=3, s=2, p=1) on NHWC input."""
    y = jax.lax.conv_general_dilated(
        x, jnp.transpose(weight, (2, 3, 1, 0)),            # HWIO
        window_strides=(2, 2), padding=((1, 1), (1, 1)),
        dimension_numbers=("NHWC", "HWIO", "NHWC"),
    )
    return y + bias.reshape(1, 1, 1, -1)


if __name__ == "__main__":
    B, H, W, Cin, Cout = 2, 16, 16, 4, 8

    key = jax.random.PRNGKey(0)
    kx, kw, kb = jax.random.split(key, 3)

    # Deterministic parameter init mimicking nn.Conv2d defaults
    # (kaiming_uniform(a=sqrt(5)) -> U(-1/sqrt(fan_in), 1/sqrt(fan_in))).
    fan_in = Cin * 3 * 3
    bound = 1.0 / (fan_in ** 0.5)
    weight = jax.random.uniform(kw, (Cout, Cin, 3, 3), jnp.float32, -bound, bound)
    bias = jax.random.uniform(kb, (Cout,), jnp.float32, -bound, bound)

    x = jax.random.normal(kx, (B, H, W, Cin), jnp.float32)

    y = downsample_pallas(x, weight, bias)
    y = jax.block_until_ready(y)

    y_ref = _reference_conv(x, weight, bias)
    assert y.shape == (B, H // 2, W // 2, Cout), y.shape
    # bf16 matmul inputs with f32 accumulation -> relaxed tolerance vs f32 ref.
    assert jnp.allclose(y, y_ref, rtol=5e-2, atol=5e-2), float(jnp.max(jnp.abs(y - y_ref)))

    print("KERNEL_OK")
</pallas_src>

<mosaic_0001>
module attributes {stable_mosaic.version = 11 : i64} {
  func.func @_downsample_mm_kernel(%arg0: i32, %arg1: memref<128x36xbf16, #tpu.memory_space<vmem>>, %arg2: memref<36x128xbf16, #tpu.memory_space<vmem>>, %arg3: memref<1x128xf32, #tpu.memory_space<vmem>>, %arg4: memref<128x128xf32, #tpu.memory_space<vmem>>) attributes {dimension_semantics = [#tpu.dimension_semantics<parallel>], iteration_bounds = array<i64: 1>, scalar_prefetch = 0 : i64, scratch_operands = 0 : i64, tpu.core_type = #tpu.core_type<tc>, window_params = [{transform_indices = @transform_0, window_bounds = array<i64: 128, 36>}, {pipeline_mode = #tpu.pipeline_mode<synchronous>, transform_indices = @transform_1, window_bounds = array<i64: 36, 128>}, {pipeline_mode = #tpu.pipeline_mode<synchronous>, transform_indices = @transform_2, window_bounds = array<i64: 1, 128>}, {transform_indices = @transform_3, window_bounds = array<i64: 128, 128>}]} {
    %c0 = arith.constant 0 : index
    %c0_0 = arith.constant 0 : index
    %0 = vector.load %arg1[%c0, %c0_0] : memref<128x36xbf16, #tpu.memory_space<vmem>>, vector<128x36xbf16>
    %c0_1 = arith.constant 0 : index
    %c0_2 = arith.constant 0 : index
    %1 = vector.load %arg2[%c0_1, %c0_2] : memref<36x128xbf16, #tpu.memory_space<vmem>>, vector<36x128xbf16>
    %cst = arith.constant dense<0.000000e+00> : vector<128x128xf32>
    %2 = tpu.matmul %0, %1, %cst {dimension_numbers = #tpu.dot_dimension_numbers<[1], [0], [0], [1], [0, 0, 1, 1], [], []>} : vector<128x36xbf16>, vector<36x128xbf16>, vector<128x128xf32> -> vector<128x128xf32>
    %c0_3 = arith.constant 0 : index
    %c0_4 = arith.constant 0 : index
    %3 = vector.load %arg3[%c0_3, %c0_4] : memref<1x128xf32, #tpu.memory_space<vmem>>, vector<1x128xf32>
    %4 = vector.broadcast %3 : vector<1x128xf32> to vector<128x128xf32>
    %5 = arith.addf %2, %4 : vector<128x128xf32>
    %c0_5 = arith.constant 0 : index
    %c0_6 = arith.constant 0 : index
    %6 = vector.load %arg4[%c0_5, %c0_6] : memref<128x128xf32, #tpu.memory_space<vmem>>, vector<128x128xf32>
    tpu.vector_store %arg4[%c0_5, %c0_6], %5 {strides = array<i32>} : memref<128x128xf32, #tpu.memory_space<vmem>>, vector<128x128xf32>,
    return
  }
  func.func @transform_0(%arg0: i32) -> (i32, i32) {
    %c0_i32 = arith.constant 0 : i32
    %c0_i32_0 = arith.constant 0 : i32
    return %arg0, %c0_i32 : i32, i32
  }
  func.func @transform_1(%arg0: i32) -> (i32, i32) {
    %c0_i32 = arith.constant 0 : i32
    %c0_i32_0 = arith.constant 0 : i32
    %c0_i32_1 = arith.constant 0 : i32
    return %c0_i32, %c0_i32_0 : i32, i32
  }
  func.func @transform_2(%arg0: i32) -> (i32, i32) {
    %c0_i32 = arith.constant 0 : i32
    %c0_i32_0 = arith.constant 0 : i32
    %c0_i32_1 = arith.constant 0 : i32
    return %c0_i32, %c0_i32_0 : i32, i32
  }
  func.func @transform_3(%arg0: i32) -> (i32, i32) {
    %c0_i32 = arith.constant 0 : i32
    %c0_i32_0 = arith.constant 0 : i32
    return %arg0, %c0_i32 : i32, i32
  }
}

</mosaic_0001>

<llo_original>
// kernel: tpu_custom_call.1
$region0: #{tpu_custom_call.1}
  #allocation0 [shape = 'u32[]', space=smem, size = 0x4, offset = 0x4, fixed_abs, tag = 'smem constant byte address 0x4 - core index']
  #allocation1 [shape = 'u32[144,128]{1,0:T(1,128)}', space=vmem, size = 0x12000, scoped, tag = 'internal scratch']
  %s0 = inlined_call_operand.vmem [shape: bf16[128,36], index: 0, kind: input, shape index: {}]
  %s1 = inlined_call_operand.vmem [shape: bf16[36,128], index: 1, kind: input, shape index: {}]
  %s2 = inlined_call_operand.vmem [shape: f32[1,128], index: 2, kind: input, shape index: {}]
  %s3 = inlined_call_operand.hbm [shape: f32[128,128], index: 3, kind: output, shape index: {}]
  %s4 = sld [smem:[#allocation0]]
  $region22: #{tpu_custom_call.1} parent=0
    _
  %s6 = ssub.s32 1, %s4
  %s7 = scalar_select 0, %s6, %s4
  $region1: #{tpu_custom_call.1} parent=0
    #allocation2 [shape = 'u8[65536]{0}', space=vmem, size = 0x10000, scoped, tag = 'output window, operand 0, single buffered']
    #allocation3 [shape = 's32[1]{0}', space=sflag, size = 0x4, scoped, tag = 'scoped memory for tpu_custom_call.1']
    %8 = vsyncpa [#allocation3], 0
    // Predicated region
    $region2: #{tpu_custom_call.1} parent=1 // pred_check
      _
    $region3: #{tpu_custom_call.1} parent=1 // pred_check_branch
      %10 = sbr.rel (0) target = $region5
    $region4: #{tpu_custom_call.1} parent=1 // pred_region
      _
    $region5: #{tpu_custom_call.1} parent=1 // pred_fallthru
      _
    // Predicated region
    $region6: #{tpu_custom_call.1} parent=1 // pred_check
      _
    $region7: #{tpu_custom_call.1} parent=1 // pred_check_branch
      %12 = sbr.rel (0) target = $region9
    $region8: #{tpu_custom_call.1} parent=1 // pred_region
      _
    $region9: #{tpu_custom_call.1} parent=1 // pred_fallthru
      _
    // Predicated region
    $region10: #{tpu_custom_call.1} parent=1 // pred_check
      _
    $region11: #{tpu_custom_call.1} parent=1 // pred_check_branch
      %14 = sbr.rel (0) target = $region13
    $region12: #{tpu_custom_call.1} parent=1 // pred_region
      _
    $region13: #{tpu_custom_call.1} parent=1 // pred_fallthru
      _
    %v16 = vld [vmem:[%s0] sm:$0xf]
    %v17 = vld [vmem:[%s0 + $0x4] sm:$0xf]
    %v18 = vld [vmem:[%s0 + $0x8] sm:$0xf]
    %v19 = vld [vmem:[%s0 + $0xc] sm:$0xf]
    %v20 = vld [vmem:[%s0 + $0x10] sm:$0xf]
    %v21 = vld [vmem:[%s0 + $0x14] sm:$0xf]
    %v22 = vld [vmem:[%s0 + $0x18] sm:$0xf]
    %v23 = vld [vmem:[%s0 + $0x1c] sm:$0xf]
    %v24 = vld [vmem:[%s0 + $0x20] sm:$0xf]
    %v25 = vld [vmem:[%s0 + $0x24] sm:$0xf]
    %v26 = vld [vmem:[%s0 + $0x28] sm:$0xf]
    %v27 = vld [vmem:[%s0 + $0x2c] sm:$0xf]
    %v28 = vld [vmem:[%s0 + $0x30] sm:$0xf]
    %v29 = vld [vmem:[%s0 + $0x34] sm:$0xf]
    %v30 = vld [vmem:[%s0 + $0x38] sm:$0xf]
    %v31 = vld [vmem:[%s0 + $0x3c] sm:$0xf]
    %v32 = vld [vmem:[%s1] sm:$0xf]
    %v33 = vld [vmem:[%s1 + $0x4] sm:$0xf]
    %v34 = vld [vmem:[%s1 + $0x8] sm:$0xf]
    %v35 = vld [vmem:[%s1 + $0xc] sm:$0xf]
    %v36 = vld [vmem:[%s1 + $0x10] sm:$0x3]
    %v37 = vld [vmem:[%s2] sm:$0x1]
    %v39 = vlaneseq
    %v40 = vshrl.u32 %v39, 7
    %v41 = vsub.s32 0, %v40
    %v42 = vrot.slane %v37, %v41
    %v60 = vunpack.c.l.b16 %v16
    %v61 = vunpack.c.l.b16 %v17
    %v62 = vunpack.c.l.b16 %v18
    %v63 = vunpack.c.l.b16 %v19
    %v64 = vunpack.c.l.b16 %v20
    %v65 = vunpack.c.l.b16 %v21
    %v66 = vunpack.c.l.b16 %v22
    %v67 = vunpack.c.l.b16 %v23
    %v68 = vunpack.c.l.b16 %v24
    %v69 = vunpack.c.l.b16 %v25
    %v70 = vunpack.c.l.b16 %v26
    %v71 = vunpack.c.l.b16 %v27
    %v72 = vunpack.c.l.b16 %v28
    %v73 = vunpack.c.l.b16 %v29
    %v74 = vunpack.c.l.b16 %v30
    %v75 = vunpack.c.l.b16 %v31
    %v76 = vpack.c.b16 %v61, %v60
    %v77 = vpack.c.b16 %v63, %v62
    %v78 = vpack.c.b16 %v65, %v64
    %v79 = vpack.c.b16 %v67, %v66
    %v80 = vpack.c.b16 %v69, %v68
    %v81 = vpack.c.b16 %v71, %v70
    %v82 = vpack.c.b16 %v73, %v72
    %v83 = vpack.c.b16 %v75, %v74
    %v89 = vunpack.c.l.b16 %v32
    %v90 = vunpack.c.l.b16 %v33
    %v91 = vunpack.c.l.b16 %v34
    %v92 = vunpack.c.l.b16 %v35
    %v93 = vunpack.c.l.b16 %v36
    %v94 = vpack.c.b16 %v90, %v89
    %v95 = vpack.c.b16 %v92, %v91
    %v96 = vpack.c.b16 %v93, %v93
    %vm99 = vcmask 293888
    %v101 = vsel %vm99, %v76, 0
    %v104 = vsel %vm99, %v77, 0
    %v107 = vsel %vm99, %v78, 0
    %v110 = vsel %vm99, %v79, 0
    %v113 = vsel %vm99, %v80, 0
    %v116 = vsel %vm99, %v81, 0
    %v119 = vsel %vm99, %v82, 0
    %v122 = vsel %vm99, %v83, 0
    %vm124 = vcmask 1041408
    %v126 = vsel %vm124, %v96, 0
    %128 = vmatprep.subr.bf16.mxu0 0
    %129 = vmatpush1.bf16.msra.mxu0 0
    %130 = vmatprep.subr.bf16.mxu0 0
    %131 = vmatpush1.bf16.msra.mxu0 0
    %132 = vmatprep.subr.bf16.mxu0 0
    %133 = vmatpush1.bf16.msra.mxu0 0
    %134 = vmatprep.subr.bf16.mxu0 0
    %135 = vmatpush1.bf16.msra.mxu0 0
    %136 = vmatprep.subr.bf16.mxu0 0
    %137 = vmatpush1.bf16.msra.mxu0 0
    %138 = vmatprep.subr.bf16.mxu0 0
    %139 = vmatpush1.bf16.msra.mxu0 %v126
    %140 = vmatprep.subr.bf16.mxu0 0
    %141 = vmatpush1.bf16.msra.mxu0 %v95
    %142 = vmatprep.subr.bf16.mxu0 0
    %143 = vmatpush1.bf16.msra.mxu0 %v94
    %144 = vmatprep.subr.bf16.mxu0 0
    %145 = vmatpush2.bf16.msra.mxu0 0
    %146 = vmatprep.subr.bf16.mxu0 0
    %147 = vmatpush2.bf16.msra.mxu0 0
    %148 = vmatprep.subr.bf16.mxu0 0
    %149 = vmatpush2.bf16.msra.mxu0 0
    %150 = vmatprep.subr.bf16.mxu0 0
    %151 = vmatpush2.bf16.msra.mxu0 0
    %152 = vmatprep.subr.bf16.mxu0 0
    %153 = vmatpush2.bf16.msra.mxu0 0
    %154 = vmatprep.subr.bf16.mxu0 0
    %155 = vmatpush2.bf16.msra.mxu0 0
    %156 = vmatprep.subr.bf16.mxu0 0
    %157 = vmatpush2.bf16.msra.mxu0 0
    %158 = vmatprep.subr.bf16.mxu0 0
    %159 = vmatpush2.bf16.msra.mxu0 0
    %160 = vmatprep.mubr.bf16.mxu0 0
    %161 = vmatmul.mubr.bf16.gmra.mxu0 %v101
    %v162 = vpop.f32.mrf.mxu0
    %v163 = vadd.f32 %v42, %v162
    %v164 = vpop.f32.mrf.mxu0
    %v165 = vpop.f32.mrf.mxu0
    %v166 = vadd.f32 %v42, %v165
    %v167 = vpop.f32.mrf.mxu0
    %168 = vmatprep.mubr.bf16.mxu0 0
    %169 = vmatmul.mubr.bf16.gmra.mxu0 %v104
    %v170 = vpop.f32.mrf.mxu0
    %v171 = vadd.f32 %v42, %v170
    %v172 = vpop.f32.mrf.mxu0
    %v173 = vpop.f32.mrf.mxu0
    %v174 = vadd.f32 %v42, %v173
    %v175 = vpop.f32.mrf.mxu0
    %176 = vmatprep.mubr.bf16.mxu0 0
    %177 = vmatmul.mubr.bf16.gmra.mxu0 %v107
    %v178 = vpop.f32.mrf.mxu0
    %v179 = vadd.f32 %v42, %v178
    %v180 = vpop.f32.mrf.mxu0
    %v181 = vpop.f32.mrf.mxu0
    %v182 = vadd.f32 %v42, %v181
    %v183 = vpop.f32.mrf.mxu0
    %184 = vmatprep.mubr.bf16.mxu0 0
    %185 = vmatmul.mubr.bf16.gmra.mxu0 %v110
    %v186 = vpop.f32.mrf.mxu0
    %v187 = vadd.f32 %v42, %v186
    %v188 = vpop.f32.mrf.mxu0
    %v189 = vpop.f32.mrf.mxu0
    %v190 = vadd.f32 %v42, %v189
    %v191 = vpop.f32.mrf.mxu0
    %192 = vmatprep.mubr.bf16.mxu0 0
    %193 = vmatmul.mubr.bf16.gmra.mxu0 %v113
    %v194 = vpop.f32.mrf.mxu0
    %v195 = vadd.f32 %v42, %v194
    %v196 = vpop.f32.mrf.mxu0
    %v197 = vpop.f32.mrf.mxu0
    %v198 = vadd.f32 %v42, %v197
    %v199 = vpop.f32.mrf.mxu0
    %200 = vmatprep.mubr.bf16.mxu0 0
    %201 = vmatmul.mubr.bf16.gmra.mxu0 %v116
    %v202 = vpop.f32.mrf.mxu0
    %v203 = vadd.f32 %v42, %v202
    %v204 = vpop.f32.mrf.mxu0
    %v205 = vpop.f32.mrf.mxu0
    %v206 = vadd.f32 %v42, %v205
    %v207 = vpop.f32.mrf.mxu0
    %208 = vmatprep.mubr.bf16.mxu0 0
    %209 = vmatmul.mubr.bf16.gmra.mxu0 %v119
    %v210 = vpop.f32.mrf.mxu0
    %v211 = vadd.f32 %v42, %v210
    %v212 = vpop.f32.mrf.mxu0
    %v213 = vpop.f32.mrf.mxu0
    %v214 = vadd.f32 %v42, %v213
    %v215 = vpop.f32.mrf.mxu0
    %216 = vmatprep.mubr.bf16.mxu0 0
    %217 = vmatmul.mubr.bf16.gmra.mxu0 %v122
    %v218 = vpop.f32.mrf.mxu0
    %v219 = vadd.f32 %v42, %v218
    %v220 = vpop.f32.mrf.mxu0
    %v221 = vpop.f32.mrf.mxu0
    %v222 = vadd.f32 %v42, %v221
    %v223 = vpop.f32.mrf.mxu0
    %224 = vdwg.mxu0
    %225 = vst [vmem:[#allocation2] sm:$0xff] %v163
    %226 = vst [vmem:[#allocation2 + $0x8] sm:$0xff] %v166
    %227 = vst [vmem:[#allocation2 + $0x10] sm:$0xff] %v171
    %228 = vst [vmem:[#allocation2 + $0x18] sm:$0xff] %v174
    %229 = vst [vmem:[#allocation2 + $0x20] sm:$0xff] %v179
    %230 = vst [vmem:[#allocation2 + $0x28] sm:$0xff] %v182
    %231 = vst [vmem:[#allocation2 + $0x30] sm:$0xff] %v187
    %232 = vst [vmem:[#allocation2 + $0x38] sm:$0xff] %v190
    %233 = vst [vmem:[#allocation2 + $0x40] sm:$0xff] %v195
    %234 = vst [vmem:[#allocation2 + $0x48] sm:$0xff] %v198
    %235 = vst [vmem:[#allocation2 + $0x50] sm:$0xff] %v203
    %236 = vst [vmem:[#allocation2 + $0x58] sm:$0xff] %v206
    %237 = vst [vmem:[#allocation2 + $0x60] sm:$0xff] %v211
    %238 = vst [vmem:[#allocation2 + $0x68] sm:$0xff] %v214
    %239 = vst [vmem:[#allocation2 + $0x70] sm:$0xff] %v219
    %240 = vst [vmem:[#allocation2 + $0x78] sm:$0xff] %v222
    // Predicated region
    $region14: #{tpu_custom_call.1} parent=1 // pred_check
      _
    $region15: #{tpu_custom_call.1} parent=1 // pred_check_branch
      %242 = sbr.rel (0) target = $region17
    $region16: #{tpu_custom_call.1} parent=1 // pred_region
      %s244 = ssub.s32 2048, 2048
      %245 = vsyncadd [#allocation3], %s244
      %s246 = sshll.u32 [#allocation2], 4
      %s247 = int_to_ptr.vmem [resolvable:$true] %s246
      %252 = dma.vmem_to_hbm [thread:$0]  %s247, 2048, %s3, [#allocation3], 128, 128, 8
    $region17: #{tpu_custom_call.1} parent=1 // pred_fallthru
      _
    // Predicated region
    $region18: #{tpu_custom_call.1} parent=1 // pred_check
      _
    $region19: #{tpu_custom_call.1} parent=1 // pred_check_branch
      %254 = sbr.rel (0) target = $region21
    $region20: #{tpu_custom_call.1} parent=1 // pred_region
      %255 = dma.done [#allocation3], 2048
    $region21: #{tpu_custom_call.1} parent=1 // pred_fallthru
      _
    %256 = vsyncpa [#allocation3], 1

</llo_original>
